<compile_context>
chip_gen: v7x
topology: tpu7x:2x2x1
jax: 0.10.0
libtpu: 0.0.40
codegen_flags: <defaults>
</compile_context>

<pallas_src>
import functools

import jax
import jax.numpy as jnp
from jax import lax
from jax.experimental import pallas as pl
from jax.experimental.pallas import tpu as pltpu

_FUSED_HEADROOM = 8 << 20      # VMEM reserved for chunk temporaries / internal scratch
_CHUNK_BYTES = 1 << 20         # ~1 MiB (f32) row-chunks inside the fused kernel


def _round_up(x, m):
    return ((x + m - 1) // m) * m


def _tpu_vmem_capacity_bytes():
    """Physical VMEM per core; falls back to the v7x value (the smallest) so sizing
    is always safe if the query is unavailable."""
    try:
        info = pltpu.get_tpu_info()
        cap = getattr(info, "vmem_capacity_bytes", None)
        if cap:
            return int(cap)
    except Exception:
        pass
    return 64 << 20


def _fake_quant(x, inv_alpha, alpha, qn, qp, out_dtype):
    """clamp -> round-half-away-from-zero -> rescale, all f32 on-vreg."""
    if x.dtype != jnp.float32:
        x = x.astype(jnp.float32)
    w = jnp.clip(x * inv_alpha, float(qn), float(qp))
    t = jnp.floor(jnp.abs(w) + 0.5)          # sign-free rounding: fewer VALU ops than
    r = jnp.where(w < 0.0, -t, t)            # the floor/ceil + compare + select variant
    return (r * alpha).astype(out_dtype)


# ----------------------------------------------------------------------------------
# Fused single-buffer path: whole (lane-padded) weight resident in ONE VMEM buffer.
# ----------------------------------------------------------------------------------
def _fused_kernel(x_hbm, o_hbm, buf, stat_ref, sem, *, qn, qp, chunk_rows):
    rows = buf.shape[0]
    n_full = rows // chunk_rows
    rem = rows - n_full * chunk_rows

    # one HBM read of the weight
    cp_in = pltpu.make_async_copy(x_hbm, buf, sem.at[0])
    cp_in.start()
    cp_in.wait()

    # ---- global min / max over the VMEM copy (chunked; running scalars in SMEM) ----
    stat_ref[0] = jnp.float32(jnp.inf)        # running min
    stat_ref[1] = jnp.float32(-jnp.inf)       # running max

    def _minmax(x):
        xf = x.astype(jnp.float32) if x.dtype != jnp.float32 else x
        stat_ref[0] = jnp.minimum(stat_ref[0], jnp.min(xf))
        stat_ref[1] = jnp.maximum(stat_ref[1], jnp.max(xf))

    if n_full > 0:
        def mm_body(i, c):
            r0 = pl.multiple_of(i * chunk_rows, chunk_rows)
            _minmax(buf[pl.ds(r0, chunk_rows), :])
            return c
        lax.fori_loop(0, n_full, mm_body, 0)
    if rem:
        _minmax(buf[pl.ds(n_full * chunk_rows, rem), :])

    x_absmax = jnp.maximum(jnp.abs(stat_ref[0]), stat_ref[1])
    alpha = (2.0 * x_absmax) / float(qp - qn)
    # all-zero-weight guard (the PyTorch reference would divide by zero / NaN here)
    alpha = jnp.where(x_absmax > 0.0, alpha, jnp.float32(1.0))
    inv_alpha = 1.0 / alpha

    # ---- in-place fake-quantization of the VMEM copy ----
    def _quant(r0, nrows):
        buf[pl.ds(r0, nrows), :] = _fake_quant(
            buf[pl.ds(r0, nrows), :], inv_alpha, alpha, qn, qp, buf.dtype)

    if n_full > 0:
        def q_body(i, c):
            r0 = pl.multiple_of(i * chunk_rows, chunk_rows)
            _quant(r0, chunk_rows)
            return c
        lax.fori_loop(0, n_full, q_body, 0)
    if rem:
        _quant(n_full * chunk_rows, rem)

    # one HBM write of the result
    cp_out = pltpu.make_async_copy(buf, o_hbm, sem.at[1])
    cp_out.start()
    cp_out.wait()


# ----------------------------------------------------------------------------------
# Tiled two-pass fallback for weights that do not fit in VMEM.
# ----------------------------------------------------------------------------------
def _minmax_partial_kernel(x_ref, pmin_ref, pmax_ref):
    """Per-block (8, lane) min/max partials.  Fully parallel across the grid (and
    across both TensorCores on v7x); the tiny cross-block combine runs in XLA."""
    x = x_ref[...]
    if x.dtype != jnp.float32:
        x = x.astype(jnp.float32)
    xr = x.reshape(x.shape[0] // 8, 8, x.shape[1])   # fold sublane groups on the VPU
    pmin_ref[...] = jnp.min(xr, axis=0)
    pmax_ref[...] = jnp.max(xr, axis=0)


def _quant_block_kernel(scale_ref, x_ref, o_ref, *, qn, qp):
    """Elementwise fake-quantization of one lane-dense block; scale = [alpha, 1/alpha]
    prefed via SMEM (computed once in the wrapper)."""
    o_ref[...] = _fake_quant(x_ref[...], scale_ref[1], scale_ref[0], qn, qp, o_ref.dtype)


# ----------------------------------------------------------------------------------
# Wrapper
# ----------------------------------------------------------------------------------
def qat_weight_quantize(weight, w_bits=8, all_positive=False,
                        block_rows=None, single_block_max_elems=None):
    """JAX/Pallas equivalent of QATWeightQuantizer(w_bits).forward(weight).

    `block_rows` / `single_block_max_elems` exist only to force the tiled fallback
    path in tests; by default all sizing is derived from the chip's VMEM capacity.
    """
    assert w_bits != 1, "Binary quantization is not supported"
    assert w_bits != 32, "w_bits == 32 returns an undefined w_q in the reference"

    if all_positive:
        qn, qp = 0, 2 ** w_bits - 1
    else:
        qn, qp = -(2 ** (w_bits - 1)), 2 ** (w_bits - 1) - 1

    orig_shape = weight.shape
    orig_dtype = weight.dtype
    itemsize = jnp.dtype(orig_dtype).itemsize
    min_sublane = 8 * (4 // itemsize)         # f32 -> 8, bf16 -> 16, int8/fp8 -> 32

    flat = weight.reshape(-1)                 # cast to f32 on-vreg in-kernel, not here
    n = flat.shape[0]

    # Lane-dense layout: widest lane count that divides n so that (in the common case)
    # no jnp.pad and no trailing slice copy is needed at all.
    lane = next((l for l in (512, 256, 128) if n % l == 0), 512)
    padded_n = _round_up(n, lane)
    if padded_n != n:
        # Zero padding (< lane elems) is neutral for x_absmax = max(|min|, max).
        flat = jnp.pad(flat, (0, padded_n - n))
    x2d = flat.reshape(padded_n // lane, lane)
    rows = x2d.shape[0]

    # ---- per-generation sizing -----------------------------------------------------
    vmem_cap = _tpu_vmem_capacity_bytes()
    vmem_limit = int((vmem_cap * 3) // 4)     # 48 MiB on v7x, 96 MiB on v5e/v6e
    if single_block_max_elems is None:
        single_block = padded_n * itemsize + _FUSED_HEADROOM <= vmem_limit
    else:
        single_block = n <= single_block_max_elems

    if single_block:
        # ---- fused path: 1 launch, 1 HBM read + 1 HBM write, single VMEM buffer ----
        chunk_rows = max(min_sublane, _CHUNK_BYTES // (lane * 4))
        out2d = pl.pallas_call(
            functools.partial(_fused_kernel, qn=qn, qp=qp, chunk_rows=chunk_rows),
            out_shape=jax.ShapeDtypeStruct(x2d.shape, x2d.dtype),
            in_specs=[pl.BlockSpec(memory_space=pl.ANY)],
            out_specs=pl.BlockSpec(memory_space=pl.ANY),
            scratch_shapes=[pltpu.VMEM(x2d.shape, x2d.dtype),
                            pltpu.SMEM((2,), jnp.float32),
                            pltpu.SemaphoreType.DMA((2,))],
            compiler_params=pltpu.CompilerParams(vmem_limit_bytes=vmem_limit),
        )(x2d)
    else:
        # ---- tiled two-pass fallback ------------------------------------------------
        if block_rows is None:
            # v7x (64 MiB VMEM, ~3.2 TB/s HBM): 4 MiB blocks so each grid step is not
            # dominated by the ~0.35 us step overhead; 2 MiB is enough on v5e/v6e.
            block_rows = (2048 if vmem_cap <= (64 << 20) else 1024) * 512 // lane
        block_rows = _round_up(max(block_rows, min_sublane), min_sublane)
        block_rows = min(block_rows, _round_up(rows, min_sublane))

        nfull = rows // block_rows            # pass 1 grids over full blocks only
        tail_rows = rows - nfull * block_rows

        if nfull > 0:
            pmin, pmax = pl.pallas_call(
                _minmax_partial_kernel,
                out_shape=(jax.ShapeDtypeStruct((nfull * 8, lane), jnp.float32),
                           jax.ShapeDtypeStruct((nfull * 8, lane), jnp.float32)),
                grid=(nfull,),
                in_specs=[pl.BlockSpec((block_rows, lane), lambda i: (i, 0))],
                out_specs=(pl.BlockSpec((8, lane), lambda i: (i, 0)),
                           pl.BlockSpec((8, lane), lambda i: (i, 0))),
                compiler_params=pltpu.CompilerParams(
                    dimension_semantics=("parallel",), vmem_limit_bytes=vmem_limit),
            )(x2d)
            wmin = jnp.min(pmin)
            wmax = jnp.max(pmax)
            if tail_rows:                     # ragged tail (< one block): tiny XLA reduce
                tail = x2d[nfull * block_rows:].astype(jnp.float32)
                wmin = jnp.minimum(wmin, jnp.min(tail))
                wmax = jnp.maximum(wmax, jnp.max(tail))
        else:
            xf = x2d.astype(jnp.float32)
            wmin, wmax = jnp.min(xf), jnp.max(xf)

        # scalar combine + alpha in XLA (negligible traffic), prefed to pass 2 via SMEM
        x_absmax = jnp.maximum(jnp.abs(wmin), wmax)
        alpha = (2.0 * x_absmax) / float(qp - qn)
        alpha = jnp.where(x_absmax > 0.0, alpha, 1.0).astype(jnp.float32)
        scale = jnp.stack([alpha, 1.0 / alpha])

        nblk = -(-rows // block_rows)         # pass 2: last block may overhang; OOB
        out2d = pl.pallas_call(               # writes are dropped, values are correct
            functools.partial(_quant_block_kernel, qn=qn, qp=qp),
            out_shape=jax.ShapeDtypeStruct(x2d.shape, x2d.dtype),
            grid=(nblk,),
            in_specs=[pl.BlockSpec(memory_space=pltpu.MemorySpace.SMEM),
                      pl.BlockSpec((block_rows, lane), lambda i: (i, 0))],
            out_specs=pl.BlockSpec((block_rows, lane), lambda i: (i, 0)),
            compiler_params=pltpu.CompilerParams(
                dimension_semantics=("parallel",), vmem_limit_bytes=vmem_limit),
        )(scale, x2d)

    if padded_n != n:
        return out2d.reshape(-1)[:n].reshape(orig_shape)
    return out2d.reshape(orig_shape)


# ----------------------------------------------------------------------------------
# Reference + self-test
# ----------------------------------------------------------------------------------
def _reference(weight, qn, qp):
    """Pure-JAX reference of WQAT.forward for verification."""
    w = weight.astype(jnp.float32)
    x_absmax = jnp.maximum(jnp.abs(w.min()), w.max())
    alpha = 2.0 * x_absmax / (qp - qn)
    q = jnp.clip(w / alpha, qn, qp)
    return (jnp.sign(q) * jnp.floor(jnp.abs(q) + 0.5) * alpha).astype(weight.dtype)


def _assert_close(out, ref, weight, qn, qp, name):
    w32 = weight.astype(jnp.float32)
    step = 2.0 * jnp.maximum(jnp.abs(w32.min()), w32.max()) / (qp - qn)
    diff = jnp.abs(out.astype(jnp.float32) - ref.astype(jnp.float32))
    exact = diff <= 1e-6
    # The kernel multiplies by a hoisted reciprocal while the reference divides; an
    # element sitting exactly on a rounding tie may (rarely) land one quantization
    # step away.  Anything else is a real bug.
    one_step = jnp.abs(diff - step) <= 1e-4 * step
    assert bool(jnp.all(exact | one_step)), f"{name}: mismatch vs reference"
    assert int(jnp.sum(~exact)) <= 4, f"{name}: too many rounding mismatches"


if __name__ == "__main__":
    k0, k1, k2 = jax.random.split(jax.random.PRNGKey(0), 3)
    w_bits = 8
    qn, qp = -(2 ** (w_bits - 1)), 2 ** (w_bits - 1) - 1

    # Conv-style weight (Cout=8, Cin=4, 3x3) -> fused single-buffer path, ragged tail.
    w1 = 0.1 * jax.random.normal(k0, (8, 4, 3, 3), dtype=jnp.float32)
    o1 = jax.block_until_ready(qat_weight_quantize(w1, w_bits=w_bits))
    assert o1.shape == w1.shape and o1.dtype == w1.dtype
    _assert_close(o1, _reference(w1, qn, qp), w1, qn, qp, "fused-ragged")

    # All-negative weight whose size divides 512 -> fused path with zero pad / slice;
    # exercises the |min|-dominant branch of x_absmax.
    w2 = -jnp.abs(0.05 * jax.random.normal(k1, (4, 8, 4, 4), dtype=jnp.float32))
    o2 = jax.block_until_ready(qat_weight_quantize(w2, w_bits=w_bits))
    assert o2.shape == w2.shape and o2.dtype == w2.dtype
    _assert_close(o2, _reference(w2, qn, qp), w2, qn, qp, "fused-negative")

    # Force the tiled two-pass fallback (9 rows with 8-row blocks: full-block pass-1
    # grid + XLA tail combine + overhanging last block in pass 2).
    w3 = 0.05 * jax.random.normal(k2, (32, 16, 3, 3), dtype=jnp.float32)
    o3 = jax.block_until_ready(
        qat_weight_quantize(w3, w_bits=w_bits, block_rows=8, single_block_max_elems=0))
    assert o3.shape == w3.shape and o3.dtype == w3.dtype
    _assert_close(o3, _reference(w3, qn, qp), w3, qn, qp, "two-pass")

    print("KERNEL_OK")
</pallas_src>

<mosaic_0001>
module attributes {stable_mosaic.version = 11 : i64} {
  func.func @_fused_kernel(%arg0: memref<1x512xf32, #tpu.memory_space<any>>, %arg1: memref<1x512xf32, #tpu.memory_space<any>>, %arg2: memref<1x512xf32, #tpu.memory_space<vmem>>, %arg3: memref<2xf32, #tpu.memory_space<smem>>, %arg4: memref<2x!tpu.dma_semaphore, #tpu.memory_space<semaphore_mem>>) attributes {dimension_semantics = [], scalar_prefetch = 0 : i64, scratch_operands = 3 : i64, tpu.core_type = #tpu.core_type<tc>} {
    %c0_i32 = arith.constant 0 : i32
    %0 = tpu.memref_slice %arg4[%c0_i32] : memref<2x!tpu.dma_semaphore, #tpu.memory_space<semaphore_mem>> -> memref<1x!tpu.dma_semaphore, #tpu.memory_space<semaphore_mem>>
    %1 = tpu.memref_squeeze %0 : memref<1x!tpu.dma_semaphore, #tpu.memory_space<semaphore_mem>> -> memref<!tpu.dma_semaphore, #tpu.memory_space<semaphore_mem>>
    tpu.enqueue_dma source(%arg0 : memref<1x512xf32, #tpu.memory_space<any>>) target(%arg2 : memref<1x512xf32, #tpu.memory_space<vmem>>) target_semaphore(%1 : memref<!tpu.dma_semaphore, #tpu.memory_space<semaphore_mem>>)
    %c0_i32_0 = arith.constant 0 : i32
    %2 = tpu.memref_slice %arg4[%c0_i32_0] : memref<2x!tpu.dma_semaphore, #tpu.memory_space<semaphore_mem>> -> memref<1x!tpu.dma_semaphore, #tpu.memory_space<semaphore_mem>>
    %3 = tpu.memref_squeeze %2 : memref<1x!tpu.dma_semaphore, #tpu.memory_space<semaphore_mem>> -> memref<!tpu.dma_semaphore, #tpu.memory_space<semaphore_mem>>
    tpu.wait_dma2 semaphore(%3 : memref<!tpu.dma_semaphore, #tpu.memory_space<semaphore_mem>>) src(%arg0 : memref<1x512xf32, #tpu.memory_space<any>>) dst(%arg2 : memref<1x512xf32, #tpu.memory_space<vmem>>)
    %cst = arith.constant 0x7F800000 : f32
    %c0 = arith.constant 0 : index
    %4 = memref.load %arg3[%c0] : memref<2xf32, #tpu.memory_space<smem>>
    memref.store %cst, %arg3[%c0] : memref<2xf32, #tpu.memory_space<smem>>
    %cst_1 = arith.constant 0xFF800000 : f32
    %c1 = arith.constant 1 : index
    %5 = memref.load %arg3[%c1] : memref<2xf32, #tpu.memory_space<smem>>
    memref.store %cst_1, %arg3[%c1] : memref<2xf32, #tpu.memory_space<smem>>
    %c0_2 = arith.constant 0 : index
    %c0_3 = arith.constant 0 : index
    %6 = vector.load %arg2[%c0_2, %c0_3] : memref<1x512xf32, #tpu.memory_space<vmem>>, vector<1x512xf32>
    %c0_4 = arith.constant 0 : index
    %7 = memref.load %arg3[%c0_4] : memref<2xf32, #tpu.memory_space<smem>>
    %8 = vector.shape_cast %6 : vector<1x512xf32> to vector<1x1x512xf32>
    %cst_5 = arith.constant dense<0x7F800000> : vector<1xf32>
    %9 = vector.multi_reduction <minimumf>, %8, %cst_5 [1, 2] : vector<1x1x512xf32> to vector<1xf32>
    %10 = vector.shape_cast %9 : vector<1xf32> to vector<1x1x1xf32>
    %11 = vector.extract %10[0, 0, 0] : f32 from vector<1x1x1xf32>
    %12 = arith.minimumf %7, %11 : f32
    %c0_6 = arith.constant 0 : index
    %13 = memref.load %arg3[%c0_6] : memref<2xf32, #tpu.memory_space<smem>>
    memref.store %12, %arg3[%c0_6] : memref<2xf32, #tpu.memory_space<smem>>
    %c1_7 = arith.constant 1 : index
    %14 = memref.load %arg3[%c1_7] : memref<2xf32, #tpu.memory_space<smem>>
    %15 = vector.shape_cast %6 : vector<1x512xf32> to vector<1x1x512xf32>
    %cst_8 = arith.constant dense<0xFF800000> : vector<1xf32>
    %16 = vector.multi_reduction <maximumf>, %15, %cst_8 [1, 2] : vector<1x1x512xf32> to vector<1xf32>
    %17 = vector.shape_cast %16 : vector<1xf32> to vector<1x1x1xf32>
    %18 = vector.extract %17[0, 0, 0] : f32 from vector<1x1x1xf32>
    %19 = arith.maximumf %14, %18 : f32
    %c1_9 = arith.constant 1 : index
    %20 = memref.load %arg3[%c1_9] : memref<2xf32, #tpu.memory_space<smem>>
    memref.store %19, %arg3[%c1_9] : memref<2xf32, #tpu.memory_space<smem>>
    %c0_10 = arith.constant 0 : index
    %21 = memref.load %arg3[%c0_10] : memref<2xf32, #tpu.memory_space<smem>>
    %22 = math.absf %21 : f32
    %c1_11 = arith.constant 1 : index
    %23 = memref.load %arg3[%c1_11] : memref<2xf32, #tpu.memory_space<smem>>
    %24 = arith.maximumf %22, %23 : f32
    %cst_12 = arith.constant 2.000000e+00 : f32
    %25 = arith.mulf %cst_12, %24 : f32
    %cst_13 = arith.constant 2.550000e+02 : f32
    %26 = arith.divf %25, %cst_13 : f32
    %cst_14 = arith.constant 0.000000e+00 : f32
    %27 = arith.cmpf ogt, %24, %cst_14 : f32
    %cst_15 = arith.constant 1.000000e+00 : f32
    %28 = arith.select %27, %26, %cst_15 : f32
    %cst_16 = arith.constant 1.000000e+00 : f32
    %29 = arith.divf %cst_16, %28 : f32
    %c0_17 = arith.constant 0 : index
    %c0_18 = arith.constant 0 : index
    %30 = vector.load %arg2[%c0_17, %c0_18] : memref<1x512xf32, #tpu.memory_space<vmem>>, vector<1x512xf32>
    %31 = vector.broadcast %29 : f32 to vector<1x512xf32>
    %32 = arith.mulf %30, %31 : vector<1x512xf32>
    %cst_19 = arith.constant -1.280000e+02 : f32
    %cst_20 = arith.constant 1.270000e+02 : f32
    %33 = vector.broadcast %cst_19 : f32 to vector<1x512xf32>
    %34 = arith.maximumf %33, %32 : vector<1x512xf32>
    %35 = vector.broadcast %cst_20 : f32 to vector<1x512xf32>
    %36 = arith.minimumf %35, %34 : vector<1x512xf32>
    %37 = math.absf %36 : vector<1x512xf32>
    %cst_21 = arith.constant 5.000000e-01 : f32
    %38 = vector.broadcast %cst_21 : f32 to vector<1x512xf32>
    %39 = arith.addf %37, %38 : vector<1x512xf32>
    %40 = math.floor %39 : vector<1x512xf32>
    %cst_22 = arith.constant 0.000000e+00 : f32
    %41 = vector.broadcast %cst_22 : f32 to vector<1x512xf32>
    %42 = arith.cmpf olt, %36, %41 : vector<1x512xf32>
    %cst_23 = arith.constant 0.000000e+00 : f32
    %43 = vector.broadcast %cst_23 : f32 to vector<1x512xf32>
    %44 = arith.subf %43, %40 : vector<1x512xf32>
    %45 = arith.select %42, %44, %40 : vector<1x512xi1>, vector<1x512xf32>
    %46 = vector.broadcast %28 : f32 to vector<1x512xf32>
    %47 = arith.mulf %45, %46 : vector<1x512xf32>
    %c0_24 = arith.constant 0 : index
    %c0_25 = arith.constant 0 : index
    %48 = vector.load %arg2[%c0_24, %c0_25] : memref<1x512xf32, #tpu.memory_space<vmem>>, vector<1x512xf32>
    tpu.vector_store %arg2[%c0_24, %c0_25], %47 {strides = array<i32>} : memref<1x512xf32, #tpu.memory_space<vmem>>, vector<1x512xf32>,
    %c1_i32 = arith.constant 1 : i32
    %49 = tpu.memref_slice %arg4[%c1_i32] : memref<2x!tpu.dma_semaphore, #tpu.memory_space<semaphore_mem>> -> memref<1x!tpu.dma_semaphore, #tpu.memory_space<semaphore_mem>>
    %50 = tpu.memref_squeeze %49 : memref<1x!tpu.dma_semaphore, #tpu.memory_space<semaphore_mem>> -> memref<!tpu.dma_semaphore, #tpu.memory_space<semaphore_mem>>
    tpu.enqueue_dma source(%arg2 : memref<1x512xf32, #tpu.memory_space<vmem>>) target(%arg1 : memref<1x512xf32, #tpu.memory_space<any>>) target_semaphore(%50 : memref<!tpu.dma_semaphore, #tpu.memory_space<semaphore_mem>>)
    %c1_i32_26 = arith.constant 1 : i32
    %51 = tpu.memref_slice %arg4[%c1_i32_26] : memref<2x!tpu.dma_semaphore, #tpu.memory_space<semaphore_mem>> -> memref<1x!tpu.dma_semaphore, #tpu.memory_space<semaphore_mem>>
    %52 = tpu.memref_squeeze %51 : memref<1x!tpu.dma_semaphore, #tpu.memory_space<semaphore_mem>> -> memref<!tpu.dma_semaphore, #tpu.memory_space<semaphore_mem>>
    tpu.wait_dma2 semaphore(%52 : memref<!tpu.dma_semaphore, #tpu.memory_space<semaphore_mem>>) src(%arg2 : memref<1x512xf32, #tpu.memory_space<vmem>>) dst(%arg1 : memref<1x512xf32, #tpu.memory_space<any>>)
    return
  }
}

</mosaic_0001>

<llo_original>
// kernel: tpu_custom_call.1
$region0: #{tpu_custom_call.1}
  #allocation0 [shape = 'u32[]', space=smem, size = 0x4, offset = 0x4, fixed_abs, tag = 'smem constant byte address 0x4 - core index']
  #allocation1 [shape = 'u32[144,128]{1,0:T(1,128)}', space=vmem, size = 0x12000, scoped, tag = 'internal scratch']
  #allocation2 [shape = 'f32[1,512]{1,0:T(1,128)}', space=vmem, size = 0x800, scoped, tag = 'scratch operand']
  #allocation3 [shape = 'f32[2]{0:T(128)}', space=smem, size = 0x200, scoped, tag = 'scratch operand']
  #allocation4 [shape = 's32[2]{0}', space=sflag, size = 0x8, scoped, tag = 'scratch operand']
  #allocation5 [shape = 's32[]', space=sflag, size = 0x4, offset = 0, fixed_abs, tag = 'sflag constant byte address 0x0 - dummy sync flag']
  #allocation6 [shape = 's32[]', space=sflag, size = 0x4, offset = 0, fixed_abs, tag = 'sflag constant byte address 0x0 - dummy sync flag']
  #allocation7 [shape = 'u32[]', space=smem, size = 0x4, offset = 0x44, fixed_abs, tag = 'smem constant byte address 0x44 - assertion arg 0']
  #allocation8 [shape = 'u32[]', space=smem, size = 0x4, offset = 0x48, fixed_abs, tag = 'smem constant byte address 0x48 - assertion arg 1']
  #allocation9 [shape = 's32[]', space=sflag, size = 0x4, offset = 0, fixed_abs, tag = 'sflag constant byte address 0x0 - dummy sync flag']
  #allocation10 [shape = 's32[]', space=sflag, size = 0x4, offset = 0, fixed_abs, tag = 'sflag constant byte address 0x0 - dummy sync flag']
  %s0 = inlined_call_operand.hbm [shape: f32[1,512], index: 0, kind: input, shape index: {}]
  %s1 = inlined_call_operand.hbm [shape: f32[1,512], index: 1, kind: output, shape index: {}]
  %s2 = sld [smem:[#allocation0]]
  $region10: #{tpu_custom_call.1} parent=0
    _
  %s4 = ssub.s32 1, %s2
  %s5 = scalar_select 0, %s4, %s2
  // Predicated region
  $region2: #{tpu_custom_call.1} parent=0 // pred_check
    _
  $region3: #{tpu_custom_call.1} parent=0 // pred_check_branch
    %7 = sbr.rel target = $region5
  $region4: #{tpu_custom_call.1} parent=0 // pred_region
    %8 = sst [smem:[#allocation7]] [#allocation6]
    %9 = sst [smem:[#allocation8]] [#allocation5]
  $region5: #{tpu_custom_call.1} parent=0 // pred_fallthru
    _
  %11 = shalt.err (0)
  %s13 = sshll.u32 [#allocation2], 4
  %s14 = int_to_ptr.vmem [resolvable:$true] %s13
  %16 = dma.hbm_to_vmem [thread:$0]  %s0, 64, %s14, [#allocation4]
  %s17 = smul.u32 1, 4
  %s18 = sshll.u32 %s17, 4
  %19 = dma.done [#allocation4], %s18
  %s20 = scalar_lea.smem [#allocation3], 0
  %21 = sst [smem:[%s20]] inf
  %s22 = scalar_lea.smem [#allocation3], 1
  %23 = sst [smem:[%s22]] -inf
  %v24 = vld [vmem:[#allocation2] sm:$0xf]
  %s25 = sld [smem:[#allocation3]]
  %v27 = vlaneseq
  %v28 = vshrl.u32 %v27, 7
  %v29 = vsub.s32 0, %v28
  %v30 = vrot.slane %v24, %v29
  %v31 = vlaneseq
  %v32 = vshrl.u32 %v31, 7
  %v33 = vsub.s32 1, %v32
  %v34 = vrot.slane %v24, %v33
  %v35 = vlaneseq
  %v36 = vshrl.u32 %v35, 7
  %v37 = vsub.s32 2, %v36
  %v38 = vrot.slane %v24, %v37
  %v39 = vlaneseq
  %v40 = vshrl.u32 %v39, 7
  %v41 = vsub.s32 3, %v40
  %v42 = vrot.slane %v24, %v41
  %vm47 = vcmask 1040384
  %v48 = vsel %vm47, %v30, inf
  %v49 = vsel %vm47, %v34, inf
  %v50 = vsel %vm47, %v38, inf
  %v51 = vsel %vm47, %v42, inf
  %v52 = vmin.f32 %v48, %v49
  %v53 = vmin.f32 %v50, %v51
  %v54 = vmin.f32 %v52, %v53
  %55 = vmin.xlane.f32.xlu0 %v54
  %v56 = vpop.xlane.xlu0 %55
  %v57 = vrot.slane %v56, 4
  %v58 = vmin.f32 %v56, %v57
  %v59 = vrot.slane %v58, 2
  %v60 = vmin.f32 %v58, %v59
  %v61 = vrot.slane %v60, 1
  %v62 = vmin.f32 %v60, %v61
  %s63 = vtos %v62
  %s64 = smin.f32 %s25, %s63
  %65 = sst [smem:[%s20]] %s64
  %s66 = sld [smem:[#allocation3 + $0x1]]
  %v67 = vsel %vm47, %v30, -inf
  %v68 = vsel %vm47, %v34, -inf
  %v69 = vsel %vm47, %v38, -inf
  %v70 = vsel %vm47, %v42, -inf
  %v71 = vmax.f32 %v67, %v68
  %v72 = vmax.f32 %v69, %v70
  %v73 = vmax.f32 %v71, %v72
  %74 = vmax.xlane.f32.xlu0 %v73
  %v75 = vpop.xlane.xlu0 %74
  %v76 = vrot.slane %v75, 4
  %v77 = vmax.f32 %v75, %v76
  %v78 = vrot.slane %v77, 2
  %v79 = vmax.f32 %v77, %v78
  %v80 = vrot.slane %v79, 1
  %v81 = vmax.f32 %v79, %v80
  %s82 = vtos %v81
  %s83 = smax.f32 %s66, %s82
  %84 = sst [smem:[%s22]] %s83
  %s85 = sld [smem:[#allocation3]]
  %s86 = sand.u32 2147483647, %s85
  %s87 = sld [smem:[#allocation3 + $0x1]]
  %s88 = smax.f32 %s86, %s87
  %s89 = smul.f32 %s88, 2.0
  %v90 = vrcp.pop 255.0
  %s91 = vtos %v90
  %s92 = smul.f32 %s89, %s91
  %p93 = scmp.gt.f32.partialorder %s88, 0.0
  %s94 = scalar_select %p93, %s92, 1.0
  %v95 = vstv %s94
  %v96 = vrcp.pop %v95
  %s97 = vtos %v96
  %v98 = vld [vmem:[#allocation2] sm:$0xf]
  %v99 = vstv %s97
  %v100 = vmul.f32 %v98, %v99
  %v101 = vmax.f32 %v100, -128.0
  %v102 = vmin.f32 %v101, 127.0
  %v103 = vand.u32 2147483647, %v102
  %v104 = vadd.f32 %v103, 0.5
  %v105 = vfloor.f32 %v104
  %vm106 = vcmp.lt.f32.partialorder %v102, 0.0
  %v107 = vsub.f32 0.0, %v105
  %v108 = vsel %vm106, %v107, %v105
  %v109 = vstv %s94
  %v110 = vmul.f32 %v108, %v109
  %v111 = vlaneseq
  %vm112 = vcmp.ge.s32.totalorder %v111, 0
  %vm113 = vcmp.lt.s32.totalorder %v111, 512
  %vm114 = vmand %vm112, %vm113
  %115 = vst.msk [vmem:[#allocation2] sm:$0xf] %vm114, %v110
  %s116 = scalar_lea.sflag [#allocation4], 1
  // Predicated region
  $region6: #{tpu_custom_call.1} parent=0 // pred_check
    _
  $region7: #{tpu_custom_call.1} parent=0 // pred_check_branch
    %118 = sbr.rel target = $region9
  $region8: #{tpu_custom_call.1} parent=0 // pred_region
    %119 = sst [smem:[#allocation7]] [#allocation10]
    %120 = sst [smem:[#allocation8]] [#allocation9]
  $region9: #{tpu_custom_call.1} parent=0 // pred_fallthru
    _
  %122 = shalt.err (0)
  %s124 = sshll.u32 [#allocation2], 4
  %s125 = int_to_ptr.vmem [resolvable:$true] %s124
  %127 = dma.vmem_to_hbm [thread:$0]  %s125, 64, %s1, %s116
  %s128 = sshll.u32 %s17, 4
  %129 = dma.done %s116, %s128
  %130 = vsyncmov [#allocation4]
  %s131 = vpop.sfrf %130
  %p132 = scmp.eq.s32.totalorder %s131, 0
  %p133 = pneg %p132
  %135 = shalt.err (%p133)
  %s136 = scalar_lea.sflag [#allocation4], 1
  %137 = vsyncmov %s136
  %s138 = vpop.sfrf %137
  %p139 = scmp.eq.s32.totalorder %s138, 0
  %p140 = pneg %p139
  %142 = shalt.err (%p140)

</llo_original>
